<compile_context>
chip_gen: v6e
topology: v6e:2x2x1
jax: 0.10.0
libtpu: 0.0.40
codegen_flags: <defaults>
</compile_context>

<pallas_src>
import functools

import jax
import jax.numpy as jnp
from jax import lax
from jax.experimental import pallas as pl
from jax.experimental.pallas import tpu as pltpu

EPS = 1e-5
ALPHA_FWD = 0.9


def _cdiv(a, b):
    return -(-a // b)


def _round_up(n, m):
    return _cdiv(n, m) * m


def _vmem_capacity_bytes():
    try:
        v = int(pltpu.get_tpu_info().vmem_capacity_bytes)
        if v > 0:
            return v
    except Exception:
        pass
    try:
        if "v7" in jax.devices()[0].device_kind.lower():
            return 64 << 20                       # v7x physical VMEM per TC
    except Exception:
        pass
    return 128 << 20                              # v4/v5e/v5p/v6e physical VMEM


def _scoped_budget(cap):
    # leave ~16 MiB headroom for surrounding XLA fusions; never claim > 100 MiB
    return int(min(max(cap - (16 << 20), 24 << 20), 100 << 20))


def _vmem_limit(need, cap):
    # scoped limit = working set + margin, clamped to the per-generation budget
    return int(min(_scoped_budget(cap), max(int(need) + (4 << 20), 8 << 20)))


def _num_tensorcores():
    try:
        info = pltpu.get_tpu_info()
        for attr in ("num_cores", "core_count", "num_tensorcores",
                     "tensorcores_per_chip", "cores_per_chip"):
            v = getattr(info, attr, None)
            if v:
                return max(1, int(v))
    except Exception:
        pass
    try:
        kind = jax.devices()[0].device_kind.lower()
        if any(t in kind for t in ("v7", "v5p", "v4")):
            return 2                              # dual-TensorCore devices
    except Exception:
        pass
    return 1                                      # v5e / v6e: single TC


def _choose_row_block(R, mult, *, per_row, budget, cap_rows):
    rb = int(budget * 0.8) // max(per_row, 1)
    rb = max(mult, rb // mult * mult)
    rb = min(rb, cap_rows)
    rb = min(rb, _round_up(R, mult))
    return rb


# ---------------- Pass 1: per-channel sum of x^2 (per-TensorCore partials) ----------------
def _sumsq_kernel(x_ref, ss_ref, *, rb, n_rows, nb_per):
    p = pl.program_id(0)
    j = pl.program_id(1)

    @pl.when(j == 0)
    def _():
        ss_ref[...] = jnp.zeros_like(ss_ref)

    x = x_ref[...].astype(jnp.float32)                        # (rb, C)
    # Mask rows past the real row count: covers the tail of the last block and
    # any clamped duplicate block of a short partition (its row0 is >= n_rows).
    row = (p * nb_per + j) * rb + lax.broadcasted_iota(jnp.int32, x.shape, 0)
    x = jnp.where(row < n_rows, x, 0.0)
    # (1, C) contribution broadcasts identically into all 8 sublanes of the
    # accumulator block; the wrapper reads sublane 0 of each partition.
    ss_ref[...] += jnp.sum(x * x, axis=0, keepdims=True)


# ---------------- Pass 2: layer-norm + folded power-norm / affine ----------------
#   out = s_ln * x_ln + s_pn * x + bias     (s_ln, s_pn precomputed in the wrapper)
def _pln_kernel(x_ref, sln_ref, spn_ref, b_ref, o_ref, *, eps):
    x = x_ref[...].astype(jnp.float32)                        # (rb, C)
    inv_c = 1.0 / x.shape[-1]
    mean = jnp.sum(x, axis=-1, keepdims=True) * inv_c
    xc = x - mean
    var_row = jnp.sum(xc * xc, axis=-1, keepdims=True) * inv_c
    x_ln = xc * lax.rsqrt(var_row + eps)
    o_ref[...] = (sln_ref[...] * x_ln + spn_ref[...] * x + b_ref[...]).astype(o_ref.dtype)


# ---------------- Fully fused single-pass kernel (x resident in VMEM) ----------------
def _pln_fused_kernel(x_ref, aw_ref, bw_ref, b_ref, o_ref, var_ref, *, eps):
    x = x_ref[...].astype(jnp.float32)                        # (R, C)
    var = jnp.sum(x * x, axis=0, keepdims=True) * (1.0 / x.shape[0])
    var_ref[...] = var

    s_ln = aw_ref[...]                                        # a * weight
    s_pn = bw_ref[...] * lax.rsqrt(var + eps)                 # (1-a) * weight * rsqrt

    inv_c = 1.0 / x.shape[-1]
    mean = jnp.sum(x, axis=-1, keepdims=True) * inv_c
    xc = x - mean
    var_row = jnp.sum(xc * xc, axis=-1, keepdims=True) * inv_c
    x_ln = xc * lax.rsqrt(var_row + eps)
    o_ref[...] = (s_ln * x_ln + s_pn * x + b_ref[...]).astype(o_ref.dtype)


def power_layer_norm(x, alpha, weight, bias, *, eps=EPS, row_block=None,
                     force_two_pass=False, num_partitions=None):
    B, T, C = x.shape
    R = B * T
    xf = x.reshape(R, C)

    w_row = weight.astype(jnp.float32).reshape(1, C)
    b_row = bias.astype(jnp.float32).reshape(1, C)
    a = jnp.clip(alpha.astype(jnp.float32), 0.0, 1.0) + eps    # folded in wrapper
    aw = a * w_row
    bw = (1.0 - a) * w_row

    cap = _vmem_capacity_bytes()
    budget = _scoped_budget(cap)
    in_b = jnp.dtype(x.dtype).itemsize
    out_b = in_b

    # ---------------- fused single-pass path (2x HBM traffic vs 3x) ----------------
    fuse_max_elems = int(0.45 * budget) // (in_b + out_b + 8)
    if (not force_two_pass) and (R * C <= fuse_max_elems):
        need = R * C * (in_b + out_b + 12) + 8 * C * 4
        out, var = pl.pallas_call(
            functools.partial(_pln_fused_kernel, eps=eps),
            out_shape=(jax.ShapeDtypeStruct((R, C), x.dtype),
                       jax.ShapeDtypeStruct((1, C), jnp.float32)),
            in_specs=[pl.BlockSpec(memory_space=pltpu.MemorySpace.VMEM)] * 4,
            out_specs=(pl.BlockSpec(memory_space=pltpu.MemorySpace.VMEM),
                       pl.BlockSpec(memory_space=pltpu.MemorySpace.VMEM)),
            compiler_params=pltpu.CompilerParams(
                vmem_limit_bytes=_vmem_limit(need, cap)),
        )(xf, aw, bw, b_row)
        # TODO(synk): on v7x, a gridded 2-sweep variant (stream x into a persistent
        # VMEM scratch while accumulating sumsq, then sweep it for the output)
        # would add DMA/compute overlap + use both TensorCores for medium shapes.
        return out.reshape(B, T, C), var.reshape(1, 1, C)

    # ---------------- two-pass streaming path ----------------
    mult = 8 if in_b >= 4 else 16
    if row_block is None:
        rb1 = _choose_row_block(R, mult, per_row=C * (2 * in_b + 4),
                                budget=budget, cap_rows=1024)
        rb2 = _choose_row_block(R, mult, per_row=C * (2 * (in_b + out_b) + 16),
                                budget=budget, cap_rows=512)
    else:
        assert row_block % mult == 0, f"row_block must be a multiple of {mult}"
        rb1 = rb2 = row_block

    # Pass 1: per-channel sum of x^2, one partial per TensorCore.
    nb = _cdiv(R, rb1)
    n_part = num_partitions if num_partitions is not None else _num_tensorcores()
    n_part = max(1, min(int(n_part), nb))
    nb_per = _cdiv(nb, n_part)
    need1 = rb1 * C * (2 * in_b + 4) + n_part * 8 * C * 4 * 2
    # TODO(synk): on v7x, confirm "parallel" shards the partition axis across both
    # TensorCores; otherwise drive it with pltpu.CORE_PARALLEL / pl.core_map.
    partials = pl.pallas_call(
        functools.partial(_sumsq_kernel, rb=rb1, n_rows=R, nb_per=nb_per),
        out_shape=jax.ShapeDtypeStruct((n_part * 8, C), jnp.float32),
        grid=(n_part, nb_per),
        in_specs=[pl.BlockSpec(
            (rb1, C), lambda p, j: (jnp.minimum(p * nb_per + j, nb - 1), 0))],
        out_specs=pl.BlockSpec((8, C), lambda p, j: (p, 0)),
        compiler_params=pltpu.CompilerParams(
            dimension_semantics=("parallel", "arbitrary"),
            vmem_limit_bytes=_vmem_limit(need1, cap)),
    )(xf)
    sumsq = partials.reshape(n_part, 8, C)[:, 0, :].sum(axis=0, keepdims=True)

    # Fold all per-channel constants once (tiny O(C) ops outside the kernels).
    var_full = sumsq * (1.0 / R)                              # masked rows contribute 0
    s_ln = aw
    s_pn = bw * lax.rsqrt(var_full + eps)

    # Pass 2: out = s_ln * layer_norm(x) + s_pn * x + bias, streamed by row tile.
    need2 = rb2 * C * (2 * (in_b + out_b) + 16) + 6 * C * 4
    out = pl.pallas_call(
        functools.partial(_pln_kernel, eps=eps),
        out_shape=jax.ShapeDtypeStruct((R, C), x.dtype),
        grid=(_cdiv(R, rb2),),
        in_specs=[
            pl.BlockSpec((rb2, C), lambda i: (i, 0)),         # x tile
            pl.BlockSpec((1, C), lambda i: (0, 0)),           # s_ln
            pl.BlockSpec((1, C), lambda i: (0, 0)),           # s_pn
            pl.BlockSpec((1, C), lambda i: (0, 0)),           # bias
        ],
        out_specs=pl.BlockSpec((rb2, C), lambda i: (i, 0)),
        compiler_params=pltpu.CompilerParams(
            dimension_semantics=("parallel",),
            vmem_limit_bytes=_vmem_limit(need2, cap)),
    )(xf, s_ln, s_pn, b_row)

    return out.reshape(B, T, C), var_full.reshape(1, 1, C)


def update_running_phi(running_phi, var, current_iter, warmup_iters, afwd=ALPHA_FWD):
    # Training-state side effect of SyncPowerFunction.forward (plain-JAX glue).
    # Matches PyTorch exactly: the *stat update* is gated on `current_iter <
    # warmup_iters` while the *normalization* branch uses `<=`.
    # TODO(synk): process_group all_reduce of running_phi and the iters/grad-accum
    # bookkeeping are host/collective side effects, not kernel ops.
    if current_iter < warmup_iters:
        running_phi = running_phi * (current_iter - 1) / current_iter + var / current_iter
    return afwd * running_phi + (1.0 - afwd) * var


def _reference(x, alpha, weight, bias, eps=EPS):
    mean = jnp.mean(x, axis=-1, keepdims=True)
    xc = x - mean
    var_row = jnp.mean(xc * xc, axis=-1, keepdims=True)
    x_ln = xc * lax.rsqrt(var_row + eps)
    var_ch = jnp.mean(x * x, axis=(0, 1)).reshape(1, 1, -1)
    x_pn = x * lax.rsqrt(var_ch + eps)
    a = jnp.clip(alpha, 0.0, 1.0) + eps
    return weight * (a * x_ln + (1.0 - a) * x_pn) + bias


if __name__ == "__main__":
    key = jax.random.PRNGKey(0)

    def _run_and_check(B, T, C, **kwargs):
        k = jax.random.fold_in(key, B * 10000 + T * 100 + C)
        kx, kw, kb = jax.random.split(k, 3)
        x = jax.random.normal(kx, (B, T, C), dtype=jnp.float32)
        weight = 1.0 + 0.1 * jax.random.normal(kw, (C,), dtype=jnp.float32)
        bias = 0.1 * jax.random.normal(kb, (C,), dtype=jnp.float32)
        alpha = jnp.array(0.5, dtype=jnp.float32)
        y, var = power_layer_norm(x, alpha, weight, bias, **kwargs)
        y = jax.block_until_ready(y)
        ref = _reference(x, alpha, weight, bias)
        assert jnp.allclose(y, ref, atol=2e-5, rtol=2e-5), (
            f"output mismatch vs reference for shape {(B, T, C)} {kwargs}")
        ref_var = jnp.mean(x * x, axis=(0, 1)).reshape(1, 1, C)
        assert jnp.allclose(var, ref_var, atol=2e-5, rtol=2e-5), (
            f"var mismatch vs reference for shape {(B, T, C)} {kwargs}")
        return y, var

    # Shape implied by the module spec (num_features=32): fused single-pass path.
    y, var = _run_and_check(2, 8, 32)

    # Side-effect buffer update (iters=1, warmup=10000) in plain JAX.
    running_phi = jnp.ones((1, 1, 32), dtype=jnp.float32)
    running_phi = update_running_phi(running_phi, var, current_iter=1,
                                     warmup_iters=10000)
    # TODO(synk): ema_gz is only touched in backward; not part of the forward pass.

    # Two-pass streaming path: 2-way split partial reduction with an odd block
    # count (clamped duplicate block masked to zero) and a non-128-multiple C.
    _run_and_check(2, 56, 96, force_two_pass=True, row_block=16, num_partitions=2)
    # Row tail handled by in-kernel masking (R=75 not divisible by the 32-row tile).
    _run_and_check(3, 25, 128, force_two_pass=True, row_block=32, num_partitions=2)
    # Default (VMEM-derived) tile sizing / single-partition reduction.
    _run_and_check(4, 64, 256, force_two_pass=True)

    print("KERNEL_OK")
</pallas_src>

<mosaic_0001>
module attributes {stable_mosaic.version = 11 : i64} {
  func.func @_pln_fused_kernel(%arg0: memref<16x32xf32, #tpu.memory_space<vmem>>, %arg1: memref<1x32xf32, #tpu.memory_space<vmem>>, %arg2: memref<1x32xf32, #tpu.memory_space<vmem>>, %arg3: memref<1x32xf32, #tpu.memory_space<vmem>>, %arg4: memref<16x32xf32, #tpu.memory_space<vmem>>, %arg5: memref<1x32xf32, #tpu.memory_space<vmem>>) attributes {dimension_semantics = [], scalar_prefetch = 0 : i64, scratch_operands = 0 : i64, tpu.core_type = #tpu.core_type<tc>} {
    %c0 = arith.constant 0 : index
    %c0_0 = arith.constant 0 : index
    %0 = vector.load %arg0[%c0, %c0_0] : memref<16x32xf32, #tpu.memory_space<vmem>>, vector<16x32xf32>
    %1 = arith.mulf %0, %0 : vector<16x32xf32>
    %cst = arith.constant dense<0.000000e+00> : vector<32xf32>
    %2 = vector.multi_reduction <add>, %1, %cst [0] : vector<16x32xf32> to vector<32xf32>
    %3 = vector.shape_cast %2 : vector<32xf32> to vector<1x32xf32>
    %cst_1 = arith.constant 6.250000e-02 : f32
    %4 = vector.broadcast %cst_1 : f32 to vector<1x32xf32>
    %5 = arith.mulf %3, %4 : vector<1x32xf32>
    %c0_2 = arith.constant 0 : index
    %c0_3 = arith.constant 0 : index
    %6 = vector.load %arg5[%c0_2, %c0_3] : memref<1x32xf32, #tpu.memory_space<vmem>>, vector<1x32xf32>
    tpu.vector_store %arg5[%c0_2, %c0_3], %5 {strides = array<i32>} : memref<1x32xf32, #tpu.memory_space<vmem>>, vector<1x32xf32>,
    %c0_4 = arith.constant 0 : index
    %c0_5 = arith.constant 0 : index
    %7 = vector.load %arg1[%c0_4, %c0_5] : memref<1x32xf32, #tpu.memory_space<vmem>>, vector<1x32xf32>
    %c0_6 = arith.constant 0 : index
    %c0_7 = arith.constant 0 : index
    %8 = vector.load %arg2[%c0_6, %c0_7] : memref<1x32xf32, #tpu.memory_space<vmem>>, vector<1x32xf32>
    %cst_8 = arith.constant 9.99999974E-6 : f32
    %9 = vector.broadcast %cst_8 : f32 to vector<1x32xf32>
    %10 = arith.addf %5, %9 : vector<1x32xf32>
    %11 = math.rsqrt %10 : vector<1x32xf32>
    %12 = arith.mulf %8, %11 : vector<1x32xf32>
    %cst_9 = arith.constant dense<0.000000e+00> : vector<16xf32>
    %13 = vector.multi_reduction <add>, %0, %cst_9 [1] : vector<16x32xf32> to vector<16xf32>
    %14 = vector.shape_cast %13 : vector<16xf32> to vector<16x1xf32>
    %cst_10 = arith.constant 3.125000e-02 : f32
    %15 = vector.broadcast %cst_10 : f32 to vector<16x1xf32>
    %16 = arith.mulf %14, %15 : vector<16x1xf32>
    %17 = vector.broadcast %16 : vector<16x1xf32> to vector<16x32xf32>
    %18 = arith.subf %0, %17 : vector<16x32xf32>
    %19 = arith.mulf %18, %18 : vector<16x32xf32>
    %cst_11 = arith.constant dense<0.000000e+00> : vector<16xf32>
    %20 = vector.multi_reduction <add>, %19, %cst_11 [1] : vector<16x32xf32> to vector<16xf32>
    %21 = vector.shape_cast %20 : vector<16xf32> to vector<16x1xf32>
    %cst_12 = arith.constant 3.125000e-02 : f32
    %22 = vector.broadcast %cst_12 : f32 to vector<16x1xf32>
    %23 = arith.mulf %21, %22 : vector<16x1xf32>
    %cst_13 = arith.constant 9.99999974E-6 : f32
    %24 = vector.broadcast %cst_13 : f32 to vector<16x1xf32>
    %25 = arith.addf %23, %24 : vector<16x1xf32>
    %26 = math.rsqrt %25 : vector<16x1xf32>
    %27 = vector.broadcast %26 : vector<16x1xf32> to vector<16x32xf32>
    %28 = arith.mulf %18, %27 : vector<16x32xf32>
    %29 = vector.broadcast %7 : vector<1x32xf32> to vector<16x32xf32>
    %30 = arith.mulf %29, %28 : vector<16x32xf32>
    %31 = vector.broadcast %12 : vector<1x32xf32> to vector<16x32xf32>
    %32 = arith.mulf %31, %0 : vector<16x32xf32>
    %33 = arith.addf %30, %32 : vector<16x32xf32>
    %c0_14 = arith.constant 0 : index
    %c0_15 = arith.constant 0 : index
    %34 = vector.load %arg3[%c0_14, %c0_15] : memref<1x32xf32, #tpu.memory_space<vmem>>, vector<1x32xf32>
    %35 = vector.broadcast %34 : vector<1x32xf32> to vector<16x32xf32>
    %36 = arith.addf %33, %35 : vector<16x32xf32>
    %c0_16 = arith.constant 0 : index
    %c0_17 = arith.constant 0 : index
    %37 = vector.load %arg4[%c0_16, %c0_17] : memref<16x32xf32, #tpu.memory_space<vmem>>, vector<16x32xf32>
    tpu.vector_store %arg4[%c0_16, %c0_17], %36 {strides = array<i32>} : memref<16x32xf32, #tpu.memory_space<vmem>>, vector<16x32xf32>,
    return
  }
}

</mosaic_0001>

<llo_original>
// kernel: tpu_custom_call.1
$region0: #{tpu_custom_call.1}
  #allocation0 [shape = 'u32[]', space=smem, size = 0x4, offset = 0x4, fixed_abs, tag = 'smem constant byte address 0x4 - core index']
  #allocation1 [shape = 'u32[144,128]{1,0:T(1,128)}', space=vmem, size = 0x12000, scoped, tag = 'internal scratch']
  %s0 = inlined_call_operand.hbm [shape: f32[16,32], index: 0, kind: input, shape index: {}]
  %s1 = inlined_call_operand.vmem [shape: f32[1,32], index: 1, kind: input, shape index: {}]
  %s2 = inlined_call_operand.vmem [shape: f32[1,32], index: 2, kind: input, shape index: {}]
  %s3 = inlined_call_operand.vmem [shape: f32[1,32], index: 3, kind: input, shape index: {}]
  %s4 = inlined_call_operand.hbm [shape: f32[16,32], index: 4, kind: output, shape index: {0}]
  %s5 = inlined_call_operand.hbm [shape: f32[1,32], index: 5, kind: output, shape index: {1}]
  %6 = xla_tuple %s4, %s5
  %s7 = sld [smem:[#allocation0]]
  $region38: #{tpu_custom_call.1} parent=0
    _
  %s9 = ssub.s32 1, %s7
  %s10 = scalar_select 0, %s9, %s7
  $region1: #{tpu_custom_call.1} parent=0
    #allocation2 [shape = 'u8[8192]{0}', space=vmem, size = 0x2000, scoped, tag = 'input window, operand 0, single buffered']
    #allocation3 [shape = 's32[1]{0}', space=sflag, size = 0x4, scoped, tag = 'scoped memory for tpu_custom_call.1']
    #allocation4 [shape = 's32[1]{0}', space=sflag, size = 0x4, scoped, tag = 'scoped memory for tpu_custom_call.1']
    #allocation5 [shape = 'u8[8192]{0}', space=vmem, size = 0x2000, scoped, tag = 'output window, operand 0, single buffered']
    #allocation6 [shape = 'u8[512]{0}', space=vmem, size = 0x400, scoped, tag = 'output window, operand 1, single buffered']
    #allocation7 [shape = 's32[1]{0}', space=sflag, size = 0x4, scoped, tag = 'scoped memory for tpu_custom_call.1']
    %11 = vsyncpa [#allocation3], 0
    %12 = vsyncpa [#allocation4], 0
    %13 = vsyncpa [#allocation7], 0
    // Predicated region
    $region2: #{tpu_custom_call.1} parent=1 // pred_check
      _
    $region3: #{tpu_custom_call.1} parent=1 // pred_check_branch
      %15 = sbr.rel (0) target = $region5
    $region4: #{tpu_custom_call.1} parent=1 // pred_region
      %s17 = ssub.s32 256, 256
      %18 = vsyncadd [#allocation3], %s17
      %s19 = sshll.u32 [#allocation2], 4
      %s20 = int_to_ptr.vmem [resolvable:$true] %s19
      %25 = dma.hbm_to_vmem [thread:$0]  %s0, 256, %s20, [#allocation3], 128, 128, 8
    $region5: #{tpu_custom_call.1} parent=1 // pred_fallthru
      _
    // Predicated region
    $region6: #{tpu_custom_call.1} parent=1 // pred_check
      _
    $region7: #{tpu_custom_call.1} parent=1 // pred_check_branch
      %27 = sbr.rel (0) target = $region9
    $region8: #{tpu_custom_call.1} parent=1 // pred_region
      _
    $region9: #{tpu_custom_call.1} parent=1 // pred_fallthru
      _
    // Predicated region
    $region10: #{tpu_custom_call.1} parent=1 // pred_check
      _
    $region11: #{tpu_custom_call.1} parent=1 // pred_check_branch
      %29 = sbr.rel (0) target = $region13
    $region12: #{tpu_custom_call.1} parent=1 // pred_region
      _
    $region13: #{tpu_custom_call.1} parent=1 // pred_fallthru
      _
    // Predicated region
    $region14: #{tpu_custom_call.1} parent=1 // pred_check
      _
    $region15: #{tpu_custom_call.1} parent=1 // pred_check_branch
      %31 = sbr.rel (0) target = $region17
    $region16: #{tpu_custom_call.1} parent=1 // pred_region
      _
    $region17: #{tpu_custom_call.1} parent=1 // pred_fallthru
      _
    // Predicated region
    $region18: #{tpu_custom_call.1} parent=1 // pred_check
      _
    $region19: #{tpu_custom_call.1} parent=1 // pred_check_branch
      %33 = sbr.rel (0) target = $region21
    $region20: #{tpu_custom_call.1} parent=1 // pred_region
      %34 = dma.done [#allocation3], 256
    $region21: #{tpu_custom_call.1} parent=1 // pred_fallthru
      _
    %v35 = vld [vmem:[#allocation2] sm:$0xff]
    %v36 = vld [vmem:[#allocation2 + $0x8] sm:$0xff]
    %v37 = vmul.f32 %v35, %v35
    %v38 = vmul.f32 %v36, %v36
    %vm39 = vcmask 261120
    %v40 = vsel %vm39, %v37, 0.0
    %v41 = vsel %vm39, %v38, 0.0
    %v42 = vadd.f32 %v40, %v41
    %v43 = vrot.slane %v42, 4
    %v44 = vadd.f32 %v42, %v43
    %v45 = vrot.slane %v44, 2
    %v46 = vadd.f32 %v44, %v45
    %v47 = vrot.slane %v46, 1
    %v48 = vadd.f32 %v46, %v47
    %v49 = vmul.f32 %v48, 0.0625
    %vm50 = vcmask 253952
    %51 = vst.msk [vmem:[#allocation6] sm:$0x1] %vm50, %v49
    %v52 = vld [vmem:[%s1] sm:$0x1]
    %v53 = vld [vmem:[%s2] sm:$0x1]
    %v54 = vadd.f32 %v49, 1e-05
    %v55 = vrsqrt.pop %v54
    %v56 = vmul.f32 %v53, %v55
    %v57 = vsel %vm39, %v35, 0.0
    %58 = vadd.xlane.f32.xlu0 %v57
    %v59 = vpop.xlane.xlu0 %58
    %v60 = vsel %vm39, %v36, 0.0
    %61 = vadd.xlane.f32.xlu0 %v60
    %v62 = vpop.xlane.xlu0 %61
    %v63 = vmul.f32 %v59, 0.03125
    %v64 = vmul.f32 %v62, 0.03125
    %v65 = vsub.f32 %v35, %v63
    %v66 = vsub.f32 %v36, %v64
    %v67 = vmul.f32 %v65, %v65
    %v68 = vmul.f32 %v66, %v66
    %v69 = vsel %vm39, %v67, 0.0
    %70 = vadd.xlane.f32.xlu0 %v69
    %v71 = vpop.xlane.xlu0 %70
    %v72 = vsel %vm39, %v68, 0.0
    %73 = vadd.xlane.f32.xlu0 %v72
    %v74 = vpop.xlane.xlu0 %73
    %v75 = vmul.f32 %v71, 0.03125
    %v76 = vmul.f32 %v74, 0.03125
    %v77 = vadd.f32 %v75, 1e-05
    %v78 = vadd.f32 %v76, 1e-05
    %v79 = vrsqrt.pop %v77
    %v80 = vrsqrt.pop %v78
    %v81 = vmul.f32 %v65, %v79
    %v82 = vmul.f32 %v66, %v80
    %v84 = vlaneseq
    %v85 = vshrl.u32 %v84, 7
    %v86 = vsub.s32 0, %v85
    %v87 = vrot.slane %v52, %v86
    %v89 = vmul.f32 %v87, %v81
    %v90 = vmul.f32 %v87, %v82
    %v92 = vlaneseq
    %v93 = vshrl.u32 %v92, 7
    %v94 = vsub.s32 0, %v93
    %v95 = vrot.slane %v56, %v94
    %v97 = vmul.f32 %v95, %v35
    %v98 = vmul.f32 %v95, %v36
    %v99 = vadd.f32 %v89, %v97
    %v100 = vadd.f32 %v90, %v98
    %v101 = vld [vmem:[%s3] sm:$0x1]
    %v103 = vlaneseq
    %v104 = vshrl.u32 %v103, 7
    %v105 = vsub.s32 0, %v104
    %v106 = vrot.slane %v101, %v105
    %v108 = vadd.f32 %v99, %v106
    %v109 = vadd.f32 %v100, %v106
    %110 = vst.msk [vmem:[#allocation5] sm:$0xff] %vm39, %v108
    %111 = vst.msk [vmem:[#allocation5 + $0x8] sm:$0xff] %vm39, %v109
    // Predicated region
    $region22: #{tpu_custom_call.1} parent=1 // pred_check
      _
    $region23: #{tpu_custom_call.1} parent=1 // pred_check_branch
      %113 = sbr.rel (0) target = $region25
    $region24: #{tpu_custom_call.1} parent=1 // pred_region
      %s115 = ssub.s32 256, 256
      %116 = vsyncadd [#allocation4], %s115
      %s117 = sshll.u32 [#allocation5], 4
      %s118 = int_to_ptr.vmem [resolvable:$true] %s117
      %123 = dma.vmem_to_hbm [thread:$0]  %s118, 256, %s4, [#allocation4], 128, 128, 8
    $region25: #{tpu_custom_call.1} parent=1 // pred_fallthru
      _
    // Predicated region
    $region26: #{tpu_custom_call.1} parent=1 // pred_check
      _
    $region27: #{tpu_custom_call.1} parent=1 // pred_check_branch
      %125 = sbr.rel (0) target = $region29
    $region28: #{tpu_custom_call.1} parent=1 // pred_region
      %s127 = ssub.s32 16, 16
      %128 = vsyncadd [#allocation7], %s127
      %s130 = sshll.u32 [#allocation6], 4
      %s131 = int_to_ptr.vmem [resolvable:$true] %s130
      %133 = dma.vmem_to_hbm [thread:$0]  %s131, 16, %s5, [#allocation7]
    $region29: #{tpu_custom_call.1} parent=1 // pred_fallthru
      _
    // Predicated region
    $region30: #{tpu_custom_call.1} parent=1 // pred_check
      _
    $region31: #{tpu_custom_call.1} parent=1 // pred_check_branch
      %135 = sbr.rel (0) target = $region33
    $region32: #{tpu_custom_call.1} parent=1 // pred_region
      %136 = dma.done [#allocation4], 256
    $region33: #{tpu_custom_call.1} parent=1 // pred_fallthru
      _
    // Predicated region
    $region34: #{tpu_custom_call.1} parent=1 // pred_check
      _
    $region35: #{tpu_custom_call.1} parent=1 // pred_check_branch
      %138 = sbr.rel (0) target = $region37
    $region36: #{tpu_custom_call.1} parent=1 // pred_region
      %139 = dma.done [#allocation7], 16
    $region37: #{tpu_custom_call.1} parent=1 // pred_fallthru
      _
    %140 = vsyncpa [#allocation3], 1
    %141 = vsyncpa [#allocation4], 1
    %142 = vsyncpa [#allocation7], 1

</llo_original>
